<compile_context>
chip_gen: v5e
topology: v5e:2x2
jax: 0.10.0
libtpu: 0.0.40
codegen_flags: <defaults>
</compile_context>

<pallas_src>
import math
import functools

import jax
import jax.numpy as jnp
from jax.experimental import pallas as pl
from jax.experimental.pallas import tpu as pltpu


def _contrastive_kernel(temp_ref, a_ref, t_ref, o_ref, denj_ref,
                        *, tile_i, decoupled):
    l = pl.program_id(0)
    it = pl.program_id(1)
    n_tiles = pl.num_programs(1)

    # Per-layer accumulator init (output block + column-sum scratch are
    # resident across the row-tile grid axis).
    @pl.when(it == 0)
    def _():
        o_ref[...] = jnp.zeros_like(o_ref)
        denj_ref[...] = jnp.zeros_like(denj_ref)

    a = a_ref[0]                      # (tile_i, D), native dtype
    t = t_ref[0]                      # (B, D),     native dtype
    B = t.shape[0]

    scale = jnp.exp(temp_ref[l])      # scalar exp(log_temperature), EUP

    # sims = einsum('i d, j d -> i j') * exp(temp); contract on the last dim of
    # both operands so Mosaic never materializes a transposed text tile.
    sims = jax.lax.dot_general(
        a, t,
        dimension_numbers=(((1,), (1,)), ((), ())),
        preferred_element_type=jnp.float32) * scale            # (tile_i, B)

    # Diagonal of the global similarity matrix for this row tile, computed
    # directly from the latents (numerator:  -log(exp(diag)) == -diag).
    i_start = pl.multiple_of(it * tile_i, tile_i)
    t_slice = t_ref[0, pl.ds(i_start, tile_i), :]               # (tile_i, D)
    diag_sims = jnp.sum(a.astype(jnp.float32) * t_slice.astype(jnp.float32),
                        axis=-1, keepdims=True) * scale         # (tile_i, 1)

    exp_sims = jnp.exp(sims)                                    # (tile_i, B)

    if decoupled:
        # Decoupled contrastive learning: zero the diagonal inside this row
        # tile before the denominator sums (default path carries no mask).
        row = jax.lax.broadcasted_iota(jnp.int32, (tile_i, B), 0) + i_start
        col = jax.lax.broadcasted_iota(jnp.int32, (tile_i, B), 1)
        exp_sims = jnp.where(row == col, 0.0, exp_sims)

    den_i = jnp.sum(exp_sims, axis=1, keepdims=True)            # (tile_i, 1)
    denj_ref[...] += jnp.sum(exp_sims, axis=0, keepdims=True)   # (1, B)

    # Row-indexed loss terms for this tile (scalar broadcast-add into block).
    o_ref[...] += (-jnp.sum(diag_sims) + 0.5 * jnp.sum(jnp.log(den_i)))

    # Finalize the layer: add the column term and take the batch mean.
    @pl.when(it == n_tiles - 1)
    def _():
        col_term = 0.5 * jnp.sum(jnp.log(denj_ref[...]))
        o_ref[...] = (o_ref[...] + col_term) * (1.0 / B)


def _vmem_budget_bytes():
    """Generation-aware per-step VMEM budget for tile selection."""
    try:
        kind = jax.devices()[0].device_kind.lower()
    except Exception:
        kind = ""
    # v5e / v6e have 128 MiB physical VMEM; v7x only 64 MiB -> be conservative.
    if "v5" in kind or "v6" in kind:
        return 48 * 1024 * 1024
    return 24 * 1024 * 1024


def _pick_tile_i(B, D, itemsize, budget):
    """Largest power-of-two row tile (divisor of B) fitting the VMEM budget."""
    def cost(t):
        # double-buffered resident text + double-buffered audio row tile
        # + f32 sims/exp intermediates (with slack).
        return 2 * B * D * itemsize + 2 * t * D * itemsize + 3 * t * B * 4

    for t in (1024, 512, 256, 128, 64, 32, 16, 8):
        if t <= B and B % t == 0 and cost(t) <= budget:
            return t
    # Tiny or awkward batch sizes: single row tile per layer (best effort).
    return B


def softmax_contrastive_loss(audio_latents, text_latents, temperatures,
                             *, decoupled_contrastive_learning=False):
    """Pallas implementation of SoftmaxContrastiveLearning.forward.

    audio_latents, text_latents: (L, B, D) (2-D inputs are promoted to L=1).
    temperatures: any shape with L elements (log-temperatures, as nn.Parameter).
    Returns a scalar f32 loss (sum over layers of the per-layer batch mean).
    """
    if audio_latents.ndim == 2:
        audio_latents = audio_latents[None, ...]
    if text_latents.ndim == 2:
        text_latents = text_latents[None, ...]

    L, B, D = audio_latents.shape
    assert text_latents.shape == (L, B, D)
    temps = jnp.reshape(temperatures, (L,)).astype(jnp.float32)

    itemsize = jnp.dtype(audio_latents.dtype).itemsize
    budget = _vmem_budget_bytes()
    tile_i = _pick_tile_i(B, D, itemsize, budget)
    num_tiles = B // tile_i

    kernel = functools.partial(_contrastive_kernel, tile_i=tile_i,
                               decoupled=decoupled_contrastive_learning)

    out = pl.pallas_call(
        kernel,
        out_shape=jax.ShapeDtypeStruct((L, 8, 128), jnp.float32),
        grid_spec=pltpu.PrefetchScalarGridSpec(
            num_scalar_prefetch=1,                      # temperatures -> SMEM
            grid=(L, num_tiles),
            in_specs=[
                # audio: one row tile per grid step
                pl.BlockSpec((1, tile_i, D), lambda l, it, temps: (l, it, 0)),
                # text: full batch, resident across the row-tile axis
                pl.BlockSpec((1, B, D), lambda l, it, temps: (l, 0, 0)),
            ],
            out_specs=pl.BlockSpec((1, 8, 128), lambda l, it, temps: (l, 0, 0)),
            scratch_shapes=[pltpu.VMEM((1, B), jnp.float32)],   # denominator_j
        ),
        compiler_params=pltpu.CompilerParams(
            dimension_semantics=("parallel", "arbitrary"),
            vmem_limit_bytes=int(min(2 * budget, 100 * 1024 * 1024)),
        ),
    )(temps, audio_latents, text_latents)

    # Per-layer losses live (broadcast) in each (8,128) block; sum outside.
    return jnp.sum(out[:, 0, 0])


def _reference_loss(audio, text, temps, decoupled=False):
    """Pure-JAX reference mirroring the PyTorch forward."""
    sims = jnp.einsum('lid,ljd->lij', audio, text,
                      precision=jax.lax.Precision.HIGHEST)
    sims = sims * jnp.exp(temps)[:, None, None]
    e = jnp.exp(sims)
    num = jnp.diagonal(e, axis1=-2, axis2=-1)                    # (L, B)
    if decoupled:
        Bn = e.shape[-1]
        e = e * (1.0 - jnp.eye(Bn, dtype=e.dtype))
    den_i = jnp.sum(e, axis=-1)
    den_j = jnp.sum(e, axis=-2)
    loss = -jnp.log(num) + 0.5 * (jnp.log(den_i) + jnp.log(den_j))
    return jnp.sum(jnp.mean(loss, axis=-1))


if __name__ == "__main__":
    key = jax.random.PRNGKey(0)
    L, B, D = 2, 8, 32
    init_temp = 10.0

    k1, k2 = jax.random.split(key)
    # L2-normalized latents (as a contrastive head would receive).
    audio = jax.random.normal(k1, (L, B, D), dtype=jnp.float32)
    text = jax.random.normal(k2, (L, B, D), dtype=jnp.float32)
    audio = audio / jnp.linalg.norm(audio, axis=-1, keepdims=True)
    text = text / jnp.linalg.norm(text, axis=-1, keepdims=True)

    # nn.Parameter(torch.ones(layers, 1, 1) * math.log(init_temp))
    temperatures = jnp.full((L, 1, 1), math.log(init_temp), dtype=jnp.float32)

    for decoupled in (False, True):
        loss = softmax_contrastive_loss(
            audio, text, temperatures,
            decoupled_contrastive_learning=decoupled)
        loss = jax.block_until_ready(loss)
        ref = _reference_loss(audio, text, jnp.reshape(temperatures, (L,)),
                              decoupled=decoupled)
        assert jnp.allclose(loss, ref, rtol=1e-4, atol=1e-4), (decoupled, loss, ref)

    print("KERNEL_OK")
</pallas_src>

<mosaic_0001>
module attributes {stable_mosaic.version = 11 : i64} {
  func.func @_contrastive_kernel(%arg0: i32, %arg1: i32, %arg2: memref<2xf32, #tpu.memory_space<smem>>, %arg3: memref<1x8x32xf32, #tpu.memory_space<vmem>>, %arg4: memref<1x8x32xf32, #tpu.memory_space<vmem>>, %arg5: memref<1x8x128xf32, #tpu.memory_space<vmem>>, %arg6: memref<1x8xf32, #tpu.memory_space<vmem>>) attributes {dimension_semantics = [#tpu.dimension_semantics<parallel>, #tpu.dimension_semantics<arbitrary>], iteration_bounds = array<i64: 2, 1>, scalar_prefetch = 1 : i64, scratch_operands = 1 : i64, tpu.core_type = #tpu.core_type<tc>, window_params = [{transform_indices = @transform_0, window_bounds = array<i64: 1, 8, 32>}, {transform_indices = @transform_1, window_bounds = array<i64: 1, 8, 32>}, {transform_indices = @transform_2, window_bounds = array<i64: 1, 8, 128>}]} {
    %c0_i32 = arith.constant 0 : i32
    %0 = arith.cmpi eq, %arg1, %c0_i32 : i32
    %1 = arith.extui %0 : i1 to i32
    %c0_i32_0 = arith.constant 0 : i32
    %2 = arith.cmpi ne, %1, %c0_i32_0 : i32
    scf.if %2 {
      %cst_27 = arith.constant 0.000000e+00 : f32
      %50 = vector.broadcast %cst_27 : f32 to vector<1x8x128xf32>
      %c0_28 = arith.constant 0 : index
      %c0_29 = arith.constant 0 : index
      %c0_30 = arith.constant 0 : index
      %51 = vector.load %arg5[%c0_28, %c0_29, %c0_30] : memref<1x8x128xf32, #tpu.memory_space<vmem>>, vector<1x8x128xf32>
      tpu.vector_store %arg5[%c0_28, %c0_29, %c0_30], %50 {strides = array<i32>} : memref<1x8x128xf32, #tpu.memory_space<vmem>>, vector<1x8x128xf32>,
      %cst_31 = arith.constant 0.000000e+00 : f32
      %52 = vector.broadcast %cst_31 : f32 to vector<1x8xf32>
      %c0_32 = arith.constant 0 : index
      %c0_33 = arith.constant 0 : index
      %53 = vector.load %arg6[%c0_32, %c0_33] : memref<1x8xf32, #tpu.memory_space<vmem>>, vector<1x8xf32>
      tpu.vector_store %arg6[%c0_32, %c0_33], %52 {strides = array<i32>} : memref<1x8xf32, #tpu.memory_space<vmem>>, vector<1x8xf32>,
    } else {
    }
    %c0 = arith.constant 0 : index
    %c0_1 = arith.constant 0 : index
    %c0_2 = arith.constant 0 : index
    %3 = vector.load %arg3[%c0, %c0_1, %c0_2] : memref<1x8x32xf32, #tpu.memory_space<vmem>>, vector<1x8x32xf32>
    %4 = vector.shape_cast %3 : vector<1x8x32xf32> to vector<8x32xf32>
    %c0_3 = arith.constant 0 : index
    %c0_4 = arith.constant 0 : index
    %c0_5 = arith.constant 0 : index
    %5 = vector.load %arg4[%c0_3, %c0_4, %c0_5] : memref<1x8x32xf32, #tpu.memory_space<vmem>>, vector<1x8x32xf32>
    %6 = vector.shape_cast %5 : vector<1x8x32xf32> to vector<8x32xf32>
    %7 = arith.index_cast %arg0 : i32 to index
    %8 = memref.load %arg2[%7] : memref<2xf32, #tpu.memory_space<smem>>
    %9 = math.exp %8 : f32
    %cst = arith.constant dense<0.000000e+00> : vector<8x8xf32>
    %10 = tpu.matmul %4, %6, %cst {dimension_numbers = #tpu.dot_dimension_numbers<[1], [1], [0], [0], [0, 0, 1, 0], [], []>} : vector<8x32xf32>, vector<8x32xf32>, vector<8x8xf32> -> vector<8x8xf32>
    %11 = vector.broadcast %9 : f32 to vector<8x8xf32>
    %12 = arith.mulf %10, %11 : vector<8x8xf32>
    %c8_i32 = arith.constant 8 : i32
    %13 = arith.muli %arg1, %c8_i32 : i32
    %14 = tpu.assume_multiple %13, 8 : i32
    %c0_6 = arith.constant 0 : index
    %15 = arith.index_cast %14 : i32 to index
    %c0_7 = arith.constant 0 : index
    %16 = vector.load %arg4[%c0_6, %15, %c0_7] : memref<1x8x32xf32, #tpu.memory_space<vmem>>, vector<1x8x32xf32>
    %17 = vector.shape_cast %16 : vector<1x8x32xf32> to vector<8x32xf32>
    %18 = arith.mulf %4, %17 : vector<8x32xf32>
    %cst_8 = arith.constant dense<0.000000e+00> : vector<8xf32>
    %19 = vector.multi_reduction <add>, %18, %cst_8 [1] : vector<8x32xf32> to vector<8xf32>
    %20 = vector.shape_cast %19 : vector<8xf32> to vector<8x1xf32>
    %21 = vector.broadcast %9 : f32 to vector<8x1xf32>
    %22 = arith.mulf %20, %21 : vector<8x1xf32>
    %23 = math.exp %12 : vector<8x8xf32>
    %cst_9 = arith.constant dense<0.000000e+00> : vector<8xf32>
    %24 = vector.multi_reduction <add>, %23, %cst_9 [1] : vector<8x8xf32> to vector<8xf32>
    %25 = vector.shape_cast %24 : vector<8xf32> to vector<8x1xf32>
    %c0_10 = arith.constant 0 : index
    %c0_11 = arith.constant 0 : index
    %26 = vector.load %arg6[%c0_10, %c0_11] : memref<1x8xf32, #tpu.memory_space<vmem>>, vector<1x8xf32>
    %cst_12 = arith.constant dense<0.000000e+00> : vector<8xf32>
    %27 = vector.multi_reduction <add>, %23, %cst_12 [0] : vector<8x8xf32> to vector<8xf32>
    %28 = vector.shape_cast %27 : vector<8xf32> to vector<1x8xf32>
    %29 = arith.addf %26, %28 : vector<1x8xf32>
    %c0_13 = arith.constant 0 : index
    %c0_14 = arith.constant 0 : index
    %30 = vector.load %arg6[%c0_13, %c0_14] : memref<1x8xf32, #tpu.memory_space<vmem>>, vector<1x8xf32>
    tpu.vector_store %arg6[%c0_13, %c0_14], %29 {strides = array<i32>} : memref<1x8xf32, #tpu.memory_space<vmem>>, vector<1x8xf32>,
    %c0_15 = arith.constant 0 : index
    %c0_16 = arith.constant 0 : index
    %c0_17 = arith.constant 0 : index
    %31 = vector.load %arg5[%c0_15, %c0_16, %c0_17] : memref<1x8x128xf32, #tpu.memory_space<vmem>>, vector<1x8x128xf32>
    %32 = vector.shape_cast %22 : vector<8x1xf32> to vector<1x8x1xf32>
    %cst_18 = arith.constant dense<0.000000e+00> : vector<1xf32>
    %33 = vector.multi_reduction <add>, %32, %cst_18 [1, 2] : vector<1x8x1xf32> to vector<1xf32>
    %34 = vector.shape_cast %33 : vector<1xf32> to vector<1x1x1xf32>
    %35 = vector.extract %34[0, 0, 0] : f32 from vector<1x1x1xf32>
    %cst_19 = arith.constant 0.000000e+00 : f32
    %36 = arith.subf %cst_19, %35 : f32
    %37 = math.log %25 : vector<8x1xf32>
    %38 = vector.shape_cast %37 : vector<8x1xf32> to vector<1x8x1xf32>
    %cst_20 = arith.constant dense<0.000000e+00> : vector<1xf32>
    %39 = vector.multi_reduction <add>, %38, %cst_20 [1, 2] : vector<1x8x1xf32> to vector<1xf32>
    %40 = vector.shape_cast %39 : vector<1xf32> to vector<1x1x1xf32>
    %41 = vector.extract %40[0, 0, 0] : f32 from vector<1x1x1xf32>
    %cst_21 = arith.constant 5.000000e-01 : f32
    %42 = arith.mulf %cst_21, %41 : f32
    %43 = arith.addf %36, %42 : f32
    %44 = vector.broadcast %43 : f32 to vector<1x8x128xf32>
    %45 = arith.addf %31, %44 : vector<1x8x128xf32>
    %c0_22 = arith.constant 0 : index
    %c0_23 = arith.constant 0 : index
    %c0_24 = arith.constant 0 : index
    %46 = vector.load %arg5[%c0_22, %c0_23, %c0_24] : memref<1x8x128xf32, #tpu.memory_space<vmem>>, vector<1x8x128xf32>
    tpu.vector_store %arg5[%c0_22, %c0_23, %c0_24], %45 {strides = array<i32>} : memref<1x8x128xf32, #tpu.memory_space<vmem>>, vector<1x8x128xf32>,
    %c0_i32_25 = arith.constant 0 : i32
    %47 = arith.cmpi eq, %arg1, %c0_i32_25 : i32
    %48 = arith.extui %47 : i1 to i32
    %c0_i32_26 = arith.constant 0 : i32
    %49 = arith.cmpi ne, %48, %c0_i32_26 : i32
    scf.if %49 {
      %c0_27 = arith.constant 0 : index
      %c0_28 = arith.constant 0 : index
      %50 = vector.load %arg6[%c0_27, %c0_28] : memref<1x8xf32, #tpu.memory_space<vmem>>, vector<1x8xf32>
      %51 = math.log %50 : vector<1x8xf32>
      %52 = vector.shape_cast %51 : vector<1x8xf32> to vector<1x1x8xf32>
      %cst_29 = arith.constant dense<0.000000e+00> : vector<1xf32>
      %53 = vector.multi_reduction <add>, %52, %cst_29 [1, 2] : vector<1x1x8xf32> to vector<1xf32>
      %54 = vector.shape_cast %53 : vector<1xf32> to vector<1x1x1xf32>
      %55 = vector.extract %54[0, 0, 0] : f32 from vector<1x1x1xf32>
      %cst_30 = arith.constant 5.000000e-01 : f32
      %56 = arith.mulf %cst_30, %55 : f32
      %c0_31 = arith.constant 0 : index
      %c0_32 = arith.constant 0 : index
      %c0_33 = arith.constant 0 : index
      %57 = vector.load %arg5[%c0_31, %c0_32, %c0_33] : memref<1x8x128xf32, #tpu.memory_space<vmem>>, vector<1x8x128xf32>
      %58 = vector.broadcast %56 : f32 to vector<1x8x128xf32>
      %59 = arith.addf %57, %58 : vector<1x8x128xf32>
      %cst_34 = arith.constant 1.250000e-01 : f32
      %60 = vector.broadcast %cst_34 : f32 to vector<1x8x128xf32>
      %61 = arith.mulf %59, %60 : vector<1x8x128xf32>
      %c0_35 = arith.constant 0 : index
      %c0_36 = arith.constant 0 : index
      %c0_37 = arith.constant 0 : index
      %62 = vector.load %arg5[%c0_35, %c0_36, %c0_37] : memref<1x8x128xf32, #tpu.memory_space<vmem>>, vector<1x8x128xf32>
      tpu.vector_store %arg5[%c0_35, %c0_36, %c0_37], %61 {strides = array<i32>} : memref<1x8x128xf32, #tpu.memory_space<vmem>>, vector<1x8x128xf32>,
    } else {
    }
    return
  }
  func.func @transform_0(%arg0: i32, %arg1: i32, %arg2: memref<2xf32, #tpu.memory_space<smem>>) -> (i32, i32, i32) {
    %c0_i32 = arith.constant 0 : i32
    %c0_i32_0 = arith.constant 0 : i32
    return %arg0, %arg1, %c0_i32 : i32, i32, i32
  }
  func.func @transform_1(%arg0: i32, %arg1: i32, %arg2: memref<2xf32, #tpu.memory_space<smem>>) -> (i32, i32, i32) {
    %c0_i32 = arith.constant 0 : i32
    %c0_i32_0 = arith.constant 0 : i32
    %c0_i32_1 = arith.constant 0 : i32
    return %arg0, %c0_i32, %c0_i32_0 : i32, i32, i32
  }
  func.func @transform_2(%arg0: i32, %arg1: i32, %arg2: memref<2xf32, #tpu.memory_space<smem>>) -> (i32, i32, i32) {
    %c0_i32 = arith.constant 0 : i32
    %c0_i32_0 = arith.constant 0 : i32
    %c0_i32_1 = arith.constant 0 : i32
    return %arg0, %c0_i32, %c0_i32_0 : i32, i32, i32
  }
}

</mosaic_0001>

<llo_original>
// kernel: tpu_custom_call.1
$region0: #{tpu_custom_call.1}
  #allocation0 [shape = 'u32[]', space=smem, size = 0x4, offset = 0x4, fixed_abs, tag = 'smem constant byte address 0x4 - core index']
  #allocation1 [shape = 'u32[72,128]{1,0:T(1,128)}', space=vmem, size = 0x9000, scoped, tag = 'internal scratch']
  #allocation2 [shape = 'f32[1,8]{1,0:T(1,128)}', space=vmem, size = 0x200, scoped, tag = 'scratch operand']
  #allocation3 [shape = 's32[1]{0}', space=sflag, size = 0x4, scoped, tag = 'scoped memory for tpu_custom_call.1']
  #allocation4 [shape = 'u8[512]{0}', space=smem, size = 0x200, scoped, tag = 'prefetched SMEM operand 0']
  %s0 = inlined_call_operand.hbm [shape: f32[2], index: 0, kind: input, shape index: {}]
  %s1 = inlined_call_operand.hbm [shape: f32[2,8,32], index: 1, kind: input, shape index: {}]
  %s2 = inlined_call_operand.hbm [shape: f32[2,8,32], index: 2, kind: input, shape index: {}]
  %s3 = inlined_call_operand.hbm [shape: f32[2,8,128], index: 3, kind: output, shape index: {}]
  %s4 = sld [smem:[#allocation0]]
  $region57: #{tpu_custom_call.1} parent=0
    _
  %s6 = ssub.s32 1, %s4
  %s7 = scalar_select 0, %s6, %s4
  %s9 = sshll.u32 %s0, 4
  %s10 = int_to_ptr.hbm [resolvable:$true] %s9
  %12 = dma.hbm_to_smem %s10, 16, [#allocation4], [#allocation3]
  %14 = dma.done [#allocation3], 16
  %15 = sfence
  $region1: #{tpu_custom_call.1} parent=0
    #allocation5 [shape = 'u8[8192]{0}', space=vmem, size = 0x2000, scoped, tag = 'input window, operand 1']
    #allocation6 [shape = 's32[2]{0}', space=sflag, size = 0x8, scoped, tag = 'scoped memory for tpu_custom_call.1']
    #allocation7 [shape = 's32[2]{0}', space=sflag, size = 0x8, scoped, tag = 'scoped memory for tpu_custom_call.1']
    #allocation8 [shape = 'u8[8192]{0}', space=vmem, size = 0x2000, scoped, tag = 'input window, operand 2']
    #allocation9 [shape = 's32[2]{0}', space=sflag, size = 0x8, scoped, tag = 'scoped memory for tpu_custom_call.1']
    #allocation10 [shape = 'u8[8192]{0}', space=vmem, size = 0x2000, scoped, tag = 'output window, operand 0']
    %16 = vsyncpa [#allocation6], 0
    %s17 = scalar_lea.sflag [#allocation6], 1
    %18 = vsyncpa %s17, 0
    %19 = vsyncpa [#allocation9], 0
    %s20 = scalar_lea.sflag [#allocation9], 1
    %21 = vsyncpa %s20, 0
    %22 = vsyncpa [#allocation7], 0
    %s23 = scalar_lea.sflag [#allocation7], 1
    %24 = vsyncpa %s23, 0
    loop: start=0, step=1, limit=4
    $region2: #{tpu_custom_call.1} parent=1 // loop_pre_header
      _
    $region3: #{tpu_custom_call.1} parent=1 // loop_header
      %s26 = sphi 0, %s30
      %p27 = scmp.ge.s32.totalorder %s26, 4
      %s33 = sphi 0, %s45
      %s34 = sphi 0, %s41
      %s35 = sphi 0, %s33
      %s36 = sphi 0, %s34
      %s37 = sphi 0, %s35
      %s38 = sphi 0, %s36
      %s50 = sphi 0, %s52
      %s53 = sphi 0, %s50
      %s54 = sphi 0, %s53
      %s70 = sphi 0, %s54
      %s76 = sphi 0, %s78
      %s79 = sphi 0, %s76
      %s80 = sphi 0, %s79
      %s96 = sphi 0, %s80
      %s102 = sphi 0, %s104
      %s105 = sphi 0, %s102
      %s106 = sphi 0, %s105
      %s122 = sphi 0, %s106
    $region4: #{tpu_custom_call.1} parent=1 // loop_header_branch
      %29 = sbr.rel (%p27) target = $region8
    $region5: #{tpu_custom_call.1} parent=1 // loop_body
      %s31 = ssub.s32 %s26, 1
      %s32 = ssub.s32 %s26, 2
      %s39 = sadd.s32 1, %s34
      %p40 = scmp.ge.s32.totalorder %s39, 1
      %s41 = scalar_select %p40, 0, %s39
      %s42 = sadd.s32 1, %s33
      %s43 = scalar_select %p40, %s42, %s33
      %p44 = scmp.ge.s32.totalorder %s43, 2
      %s45 = scalar_select %p44, 0, %s43
      %s46 = ssub.s32 %s33, %s45
      %s47 = ssub.s32 %s34, %s41
      %s48 = sor.u32 %s46, %s47
      %p49 = scmp.eq.s32.totalorder %s48, 0
      %s51 = sadd.s32 %s50, 1
      %s52 = scalar_select %p49, %s50, %s51
      %p55 = pneg %p49
      %p56 = scmp.eq.s32.totalorder %s26, 1
      %p57 = por %p55, %p56
      %p58 = scmp.ne.s32.totalorder %s50, %s53
      %p59 = scmp.eq.s32.totalorder %s26, 0
      %p60 = por %p58, %p59
      %p61 = scmp.ne.s32.totalorder %s50, %s53
      %p62 = scmp.eq.s32.totalorder %s31, 1
      %p63 = por %p61, %p62
      %p64 = scmp.ne.s32.totalorder %s53, %s54
      %p65 = scmp.eq.s32.totalorder %s31, 0
      %p66 = por %p64, %p65
      %p67 = scmp.ne.s32.totalorder %s53, %s54
      %p68 = scmp.eq.s32.totalorder %s32, 1
      %p69 = por %p67, %p68
      %p71 = scmp.ne.s32.totalorder %s54, %s70
      %p72 = scmp.eq.s32.totalorder %s32, 0
      %p73 = por %p71, %p72
      %s74 = ssub.s32 %s33, %s45
      %p75 = scmp.eq.s32.totalorder %s74, 0
      %s77 = sadd.s32 %s76, 1
      %s78 = scalar_select %p75, %s76, %s77
      %p81 = pneg %p75
      %p82 = scmp.eq.s32.totalorder %s26, 1
      %p83 = por %p81, %p82
      %p84 = scmp.ne.s32.totalorder %s76, %s79
      %p85 = scmp.eq.s32.totalorder %s26, 0
      %p86 = por %p84, %p85
      %p87 = scmp.ne.s32.totalorder %s76, %s79
      %p88 = scmp.eq.s32.totalorder %s31, 1
      %p89 = por %p87, %p88
      %p90 = scmp.ne.s32.totalorder %s79, %s80
      %p91 = scmp.eq.s32.totalorder %s31, 0
      %p92 = por %p90, %p91
      %p93 = scmp.ne.s32.totalorder %s79, %s80
      %p94 = scmp.eq.s32.totalorder %s32, 1
      %p95 = por %p93, %p94
      %p97 = scmp.ne.s32.totalorder %s80, %s96
      %p98 = scmp.eq.s32.totalorder %s32, 0
      %p99 = por %p97, %p98
      %s100 = ssub.s32 %s33, %s45
      %p101 = scmp.eq.s32.totalorder %s100, 0
      %s103 = sadd.s32 %s102, 1
      %s104 = scalar_select %p101, %s102, %s103
      %p107 = pneg %p101
      %p108 = scmp.eq.s32.totalorder %s26, 1
      %p109 = por %p107, %p108
      %p110 = scmp.ne.s32.totalorder %s102, %s105
      %p111 = scmp.eq.s32.totalorder %s26, 0
      %p112 = por %p110, %p111
      %p113 = scmp.ne.s32.totalorder %s102, %s105
      %p114 = scmp.eq.s32.totalorder %s31, 1
      %p115 = por %p113, %p114
      %p116 = scmp.ne.s32.totalorder %s105, %s106
      %p117 = scmp.eq.s32.totalorder %s31, 0
      %p118 = por %p116, %p117
      %p119 = scmp.ne.s32.totalorder %s105, %s106
      %p120 = scmp.eq.s32.totalorder %s32, 1
      %p121 = por %p119, %p120
      %p123 = scmp.ne.s32.totalorder %s106, %s122
      %p124 = scmp.eq.s32.totalorder %s32, 0
      %p125 = por %p123, %p124
      %p126 = scmp.le.s32.totalorder 1, %s26
      %p127 = scmp.lt.s32.totalorder %s26, 3
      %p128 = pnand %p126, %p127
      %p129 = pneg %p128
      // Predicated region
      $region9: #{tpu_custom_call.1} parent=5 // pred_check
        _
      $region10: #{tpu_custom_call.1} parent=5 // pred_check_branch
        %131 = sbr.rel (%p128) target = $region12
      $region11: #{tpu_custom_call.1} parent=5 // pred_region
        %s132 = ssub.s32 %s26, 1
      $region12: #{tpu_custom_call.1} parent=5 // pred_fallthru
        _
      %p133 = scmp.lt.s32.totalorder %s26, 2
      // Predicated region
      $region13: #{tpu_custom_call.1} parent=5 // pred_check
        %p134 = pneg %p133
      $region14: #{tpu_custom_call.1} parent=5 // pred_check_branch
        %136 = sbr.rel (%p134) target = $region16
      $region15: #{tpu_custom_call.1} parent=5 // pred_region
        // Predicated region
        $region17: #{tpu_custom_call.1} parent=15 // pred_check
          %p137 = pneg %p60
        $region18: #{tpu_custom_call.1} parent=15 // pred_check_branch
          %139 = sbr.rel (%p137) target = $region20
        $region19: #{tpu_custom_call.1} parent=15 // pred_region
          %s140 = sand.u32 %s50, 1
          %s141 = scalar_lea.sflag [#allocation6], %s140
          %s142 = sand.u32 %s50, 1
          %s143 = smul.addr %s142, 8
          %s144 = scalar_lea.vmem [#allocation5], %s143
          %146 = vsyncadd %s141, 0
          %s147 = sadd.s32 %s34, %s33
          %s148 = smul.addr %s147, 8
          %s149 = scalar_lea.hbm %s1, %s148
          %s151 = sshll.u32 %s149, 4
          %s152 = int_to_ptr.hbm [resolvable:$true] %s151
          %s153 = sshll.u32 %s144, 4
          %s154 = int_to_ptr.vmem [resolvable:$true] %s153
          %156 = dma.hbm_to_vmem [thread:$0]  %s152, 128, %s154, %s141
        $region20: #{tpu_custom_call.1} parent=15 // pred_fallthru
          _
        // Predicated region
        $region21: #{tpu_custom_call.1} parent=15 // pred_check
          %p157 = pneg %p86
        $region22: #{tpu_custom_call.1} parent=15 // pred_check_branch
          %159 = sbr.rel (%p157) target = $region24
        $region23: #{tpu_custom_call.1} parent=15 // pred_region
          %s160 = sand.u32 %s76, 1
          %s161 = scalar_lea.sflag [#allocation9], %s160
          %s162 = sand.u32 %s76, 1
          %s163 = smul.addr %s162, 8
          %s164 = scalar_lea.vmem [#allocation8], %s163
          %166 = vsyncadd %s161, 0
          %s167 = smul.addr %s33, 8
          %s168 = scalar_lea.hbm %s2, %s167
          %s170 = sshll.u32 %s168, 4
          %s171 = int_to_ptr.hbm [resolvable:$true] %s170
          %s172 = sshll.u32 %s164, 4
          %s173 = int_to_ptr.vmem [resolvable:$true] %s172
          %175 = dma.hbm_to_vmem [thread:$0]  %s171, 128, %s173, %s161
        $region24: #{tpu_custom_call.1} parent=15 // pred_fallthru
          _
      $region16: #{tpu_custom_call.1} parent=5 // pred_fallthru
        _
      %p176 = scmp.le.s32.totalorder 1, %s26
      %p177 = scmp.lt.s32.totalorder %s26, 3
      %p178 = pnand %p176, %p177
      %p179 = pneg %p178
      // Predicated region
      $region25: #{tpu_custom_call.1} parent=5 // pred_check
        _
      $region26: #{tpu_custom_call.1} parent=5 // pred_check_branch
        %181 = sbr.rel (%p178) target = $region28
      $region27: #{tpu_custom_call.1} parent=5 // pred_region
        %s182 = ssub.s32 %s26, 1
        %s183 = sand.u32 %s53, 1
        %s184 = scalar_lea.sflag [#allocation6], %s183
        %s185 = sand.u32 %s53, 1
        %s186 = smul.addr %s185, 8
        %s187 = scalar_lea.vmem [#allocation5], %s186
        // Predicated region
        $region29: #{tpu_custom_call.1} parent=27 // pred_check
          %p188 = pneg %p66
        $region30: #{tpu_custom_call.1} parent=27 // pred_check_branch
          %190 = sbr.rel (%p188) target = $region32
        $region31: #{tpu_custom_call.1} parent=27 // pred_region
          %192 = dma.done %s184, 128
        $region32: #{tpu_custom_call.1} parent=27 // pred_fallthru
          _
        %s193 = sand.u32 %s79, 1
        %s194 = scalar_lea.sflag [#allocation9], %s193
        %s195 = sand.u32 %s79, 1
        %s196 = smul.addr %s195, 8
        %s197 = scalar_lea.vmem [#allocation8], %s196
        // Predicated region
        $region33: #{tpu_custom_call.1} parent=27 // pred_check
          %p198 = pneg %p92
        $region34: #{tpu_custom_call.1} parent=27 // pred_check_branch
          %200 = sbr.rel (%p198) target = $region36
        $region35: #{tpu_custom_call.1} parent=27 // pred_region
          %202 = dma.done %s194, 128
        $region36: #{tpu_custom_call.1} parent=27 // pred_fallthru
          _
        %s203 = sand.u32 %s53, 1
        %s204 = scalar_lea.sflag [#allocation6], %s203
        %s205 = sand.u32 %s53, 1
        %s206 = smul.addr %s205, 8
        %s207 = scalar_lea.vmem [#allocation5], %s206
        %p208 = pneg %p66
        %p209 = pneg %p63
        %s210 = sand.u32 %s79, 1
        %s211 = scalar_lea.sflag [#allocation9], %s210
        %s212 = sand.u32 %s79, 1
        %s213 = smul.addr %s212, 8
        %s214 = scalar_lea.vmem [#allocation8], %s213
        %p215 = pneg %p92
        %p216 = pneg %p89
        %p217 = pneg %p118
        %p218 = pneg %p115
        %s219 = sand.u32 %s105, 1
        %s220 = scalar_lea.sflag [#allocation7], %s219
        %s221 = sand.u32 %s105, 1
        %s222 = smul.addr %s221, 8
        %s223 = scalar_lea.vmem [#allocation10], %s222
        %p224 = scmp.eq.s32.totalorder %s36, 0
        // Predicated region
        $region37: #{tpu_custom_call.1} parent=27 // pred_check
          %p225 = pneg %p224
        $region38: #{tpu_custom_call.1} parent=27 // pred_check_branch
          %227 = sbr.rel (%p225) target = $region40
        $region39: #{tpu_custom_call.1} parent=27 // pred_region
          %228 = vst [vmem:[%s223] sm:$0xff] 0.0
          %vm229 = vcmask 57344
          %230 = vst.msk [vmem:[#allocation2] sm:$0x1] %vm229, 0.0
        $region40: #{tpu_custom_call.1} parent=27 // pred_fallthru
          _
        %v231 = vld [vmem:[%s187] sm:$0xff]
        %v232 = vld [vmem:[%s197] sm:$0xff]
        %s233 = sld [smem:[#allocation4 + %s35]]
        %v234 = vstv %s233
        %v235 = vmul.f32 %v234, 1.442695
        %v236 = vpow.pop %v235
        %s237 = vtos %v236
        %vm238 = vcmask 261120
        %v240 = vsel %vm238, %v231, 0
        %v243 = vsel %vm238, %v232, 0
        %245 = vmatpush.xpose.msra.mxu0 0.0
        %246 = vmatpush.xpose.msra.mxu0 0.0
        %247 = vmatpush.xpose.msra.mxu0 0.0
        %248 = vmatpush.xpose.msra.mxu0 0.0
        %249 = vmatpush.xpose.msra.mxu0 0.0
        %250 = vmatpush.xpose.msra.mxu0 0.0
        %251 = vmatpush.xpose.msra.mxu0 0.0
        %252 = vmatpush.xpose.msra.mxu0 0.0
        %253 = vmatpush.xpose.msra.mxu0 0.0
        %254 = vmatpush.xpose.msra.mxu0 0.0
        %255 = vmatpush.xpose.msra.mxu0 0.0
        %256 = vmatpush.xpose.msra.mxu0 0.0
        %257 = vmatpush.xpose.msra.mxu0 0.0
        %258 = vmatpush.xpose.msra.mxu0 0.0
        %259 = vmatpush.xpose.msra.mxu0 0.0
        %260 = vmatpush.xpose.msra.mxu0 %v243
        %261 = vmatmul.f32.gmra.mxu0 %v240
        %v262 = vpop.f32.mrf.mxu0
        %v263 = vadd.f32 0.0, %v262
        %264 = vdwg.mxu0
        %v265 = vstv %s237
        %v266 = vmul.f32 %v263, %v265
        %s267 = smul.u32 %s36, 8
        %s268 = scalar_lea.vmem %s197, %s267 [#allocation8]
        %v269 = vld [vmem:[%s268] sm:$0xff]
        %v270 = vmul.f32 %v231, %v269
        %v271 = vsel %vm238, %v270, 0.0
        %272 = vadd.xlane.f32.xlu0 %v271
        %v273 = vpop.xlane.xlu0 %272
        %v274 = vmul.f32 %v273, %v265
        %v275 = vmul.f32 %v266, 1.442695
        %v276 = vpow.pop %v275
        %vm277 = vcmask 64512
        %v278 = vsel %vm277, %v276, 0.0
        %279 = vadd.xlane.f32.xlu0 %v278
        %v280 = vpop.xlane.xlu0 %279
        %v281 = vld [vmem:[#allocation2] sm:$0x1]
        %v282 = vrot.slane %v278, 4
        %v283 = vadd.f32 %v278, %v282
        %v284 = vrot.slane %v283, 2
        %v285 = vadd.f32 %v283, %v284
        %v286 = vrot.slane %v285, 1
        %v287 = vadd.f32 %v285, %v286
        %v288 = vadd.f32 %v281, %v287
        %vm289 = vcmask 57344
        %290 = vst.msk [vmem:[#allocation2] sm:$0x1] %vm289, %v288
        %v291 = vld [vmem:[%s223] sm:$0xff]
        %vm292 = vcmask 7168
        %v293 = vsel %vm292, %v274, 0.0
        %294 = vadd.xlane.f32.xlu0 %v293
        %v295 = vpop.xlane.xlu0 %294
        %v296 = vrot.slane %v295, 4
        %v297 = vadd.f32 %v295, %v296
        %v298 = vrot.slane %v297, 2
        %v299 = vadd.f32 %v297, %v298
        %v300 = vrot.slane %v299, 1
        %v301 = vadd.f32 %v299, %v300
        %s302 = vtos %v301
        %s303 = ssub.f32 0.0, %s302
        %v304 = vlog2.pop %v280
        %v305 = vmul.f32 %v304, 0.6931472
        %v306 = vsel %vm292, %v305, 0.0
        %307 = vadd.xlane.f32.xlu0 %v306
        %v308 = vpop.xlane.xlu0 %307
        %v309 = vrot.slane %v308, 4
        %v310 = vadd.f32 %v308, %v309
        %v311 = vrot.slane %v310, 2
        %v312 = vadd.f32 %v310, %v311
        %v313 = vrot.slane %v312, 1
        %v314 = vadd.f32 %v312, %v313
        %s315 = vtos %v314
        %s316 = smul.f32 %s315, 0.5
        %s317 = sadd.f32 %s303, %s316
        %v318 = vstv %s317
        %v319 = vadd.f32 %v291, %v318
        %320 = vst [vmem:[%s223] sm:$0xff] %v319
        // Predicated region
        $region41: #{tpu_custom_call.1} parent=27 // pred_check
          %p321 = pneg %p224
        $region42: #{tpu_custom_call.1} parent=27 // pred_check_branch
          %323 = sbr.rel (%p321) target = $region44
        $region43: #{tpu_custom_call.1} parent=27 // pred_region
          %v324 = vld [vmem:[#allocation2] sm:$0x1]
          %v325 = vlog2.pop %v324
          %v326 = vmul.f32 %v325, 0.6931472
          %v327 = vsel %vm289, %v326, 0.0
          %328 = vadd.xlane.f32.xlu0 %v327
          %v329 = vpop.xlane.xlu0 %328
          %v330 = vrot.slane %v329, 4
          %v331 = vadd.f32 %v329, %v330
          %v332 = vrot.slane %v331, 2
          %v333 = vadd.f32 %v331, %v332
          %v334 = vrot.slane %v333, 1
          %v335 = vadd.f32 %v333, %v334
          %s336 = vtos %v335
          %s337 = smul.f32 %s336, 0.5
          %v338 = vld [vmem:[%s223] sm:$0xff]
          %v339 = vstv %s337
          %v340 = vadd.f32 %v338, %v339
          %v341 = vmul.f32 %v340, 0.125
          %342 = vst [vmem:[%s223] sm:$0xff] %v341
        $region44: #{tpu_custom_call.1} parent=27 // pred_fallthru
          _
        %s343 = sand.u32 %s105, 1
        %s344 = scalar_lea.sflag [#allocation7], %s343
        %s345 = sand.u32 %s105, 1
        %s346 = smul.addr %s345, 8
        %s347 = scalar_lea.vmem [#allocation10], %s346
        // Predicated region
        $region45: #{tpu_custom_call.1} parent=27 // pred_check
          %p348 = pneg %p115
        $region46: #{tpu_custom_call.1} parent=27 // pred_check_branch
          %350 = sbr.rel (%p348) target = $region48
        $region47: #{tpu_custom_call.1} parent=27 // pred_region
          %352 = vsyncadd %s344, 0
          %s353 = smul.addr %s35, 8
          %s354 = scalar_lea.hbm %s3, %s353
          %s356 = sshll.u32 %s347, 4
          %s357 = int_to_ptr.vmem [resolvable:$true] %s356
          %s358 = sshll.u32 %s354, 4
          %s359 = int_to_ptr.hbm [resolvable:$true] %s358
          %361 = dma.vmem_to_hbm [thread:$0]  %s357, 128, %s359, %s344
        $region48: #{tpu_custom_call.1} parent=27 // pred_fallthru
          _
      $region28: #{tpu_custom_call.1} parent=5 // pred_fallthru
        _
      %p362 = scmp.le.s32.totalorder 2, %s26
      // Predicated region
      $region49: #{tpu_custom_call.1} parent=5 // pred_check
        %p363 = pneg %p362
      $region50: #{tpu_custom_call.1} parent=5 // pred_check_branch
        %365 = sbr.rel (%p363) target = $region52
      $region51: #{tpu_custom_call.1} parent=5 // pred_region
        %s366 = ssub.s32 %s26, 2
        // Predicated region
        $region53: #{tpu_custom_call.1} parent=51 // pred_check
          %p367 = pneg %p121
        $region54: #{tpu_custom_call.1} parent=51 // pred_check_branch
          %369 = sbr.rel (%p367) target = $region56
        $region55: #{tpu_custom_call.1} parent=51 // pred_region
          %s370 = sand.u32 %s106, 1
          %s371 = scalar_lea.sflag [#allocation7], %s370
          %s372 = sand.u32 %s106, 1
          %s373 = smul.addr %s372, 8
          %s374 = scalar_lea.vmem [#allocation10], %s373
          %376 = dma.done %s371, 128
        $region56: #{tpu_custom_call.1} parent=51 // pred_fallthru
          _
      $region52: #{tpu_custom_call.1} parent=5 // pred_fallthru
        _
    $region6: #{tpu_custom_call.1} parent=1 // loop_footer
      %s30 = sadd.s32 1, %s26
    $region7: #{tpu_custom_call.1} parent=1 // loop_footer_branch
      %25 = sbr.rel target = $region3
    $region8: #{tpu_custom_call.1} parent=1 // loop_exit
      _
    %377 = vsyncpa [#allocation6], 1
    %s378 = scalar_lea.sflag [#allocation6], 1
    %379 = vsyncpa %s378, 1
    %380 = vsyncpa [#allocation9], 1
    %s381 = scalar_lea.sflag [#allocation9], 1
    %382 = vsyncpa %s381, 1
    %383 = vsyncpa [#allocation7], 1
    %s384 = scalar_lea.sflag [#allocation7], 1
    %385 = vsyncpa %s384, 1

</llo_original>
